<compile_context>
chip_gen: v7x
topology: tpu7x:2x2x1
jax: 0.10.0
libtpu: 0.0.40
codegen_flags: <defaults>
</compile_context>

<pallas_src>
import functools

import jax
import jax.numpy as jnp
from jax import lax
from jax.experimental import pallas as pl
from jax.experimental.pallas import tpu as pltpu


def _round_up(x, m):
    return ((x + m - 1) // m) * m


def _cdiv(a, b):
    return -(-a // b)


# Number of simultaneously-live (L, L, bt)-shaped f32/i32 temporaries the
# kernel body holds (x, rel_diff, mask, |x|, exp/log1p, masked loss, int
# mask); used by the byte-accurate tile-size model.
_LIVE_TEMPS = 6


def _vmem_plan():
    """Returns (vmem_limit_bytes, temp_budget_bytes, prefer_split)."""
    cap = None
    try:
        cap = int(pltpu.get_tpu_info().vmem_capacity_bytes)
    except Exception:  # info query unavailable -> be conservative
        cap = None
    if cap is None or cap <= 64 * 1024 * 1024:
        # v7x-like: 64 MiB VMEM per TensorCore, 2 TensorCores -> keep a lower
        # cap and prefer >= 2 grid steps for the "parallel" axis.
        return 40 * 1024 * 1024, 24 * 1024 * 1024, True
    # v5e / v6e: 128 MiB physical VMEM, single TensorCore -> big tiles, as few
    # grid steps as possible.
    return 96 * 1024 * 1024, 72 * 1024 * 1024, False


def _pairwise_logistic_kernel_lanes(s_ref, r_ref, sum_ref, cnt_ref, *,
                                    temperature, softmax_outputs):
    """Batch-on-lanes layout: s_ref / r_ref are (L, bt) with bt % 128 == 0."""
    s = s_ref[...].astype(jnp.float32)            # (L, bt)
    r = r_ref[...].astype(jnp.float32)            # (L, bt)

    if softmax_outputs:
        s = jax.nn.softmax(s, axis=0)             # softmax over the item axis

    # Fold the temperature into the scores once per tile:
    #   -T * (s_i - s_j) == t_i - t_j   with  t = -T * s.
    t = s * jnp.float32(-temperature)

    x = t[:, None, :] - t[None, :, :]             # (L, L, bt)
    rel_diff = r[:, None, :] - r[None, :, :]      # (L, L, bt)
    mask = rel_diff > 0.0

    # Numerically stable softplus(x) == log1p(exp(x)).
    loss = jnp.maximum(x, 0.0) + jnp.log1p(jnp.exp(-jnp.abs(x)))

    # Reduce over both item axes, keep the batch on lanes -> lane-dense (1, bt)
    # partials (unmasked stores); cross-lane/tile reduce happens in plain JAX.
    sum_ref[...] = jnp.sum(jnp.where(mask, loss, 0.0), axis=(0, 1))[None, :]
    cnt_ref[...] = jnp.sum(mask.astype(jnp.int32), axis=(0, 1))[None, :]


def _pairwise_logistic_kernel_rows(s_ref, r_ref, sum_ref, cnt_ref, *,
                                   temperature, softmax_outputs):
    """Row-major layout (L >= 128): s_ref / r_ref are (bt, L)."""
    s = s_ref[...].astype(jnp.float32)            # (bt, L)
    r = r_ref[...].astype(jnp.float32)

    if softmax_outputs:
        s = jax.nn.softmax(s, axis=-1)

    t = s * jnp.float32(-temperature)

    x = t[:, :, None] - t[:, None, :]             # (bt, L, L)
    rel_diff = r[:, :, None] - r[:, None, :]
    mask = rel_diff > 0.0

    loss = jnp.maximum(x, 0.0) + jnp.log1p(jnp.exp(-jnp.abs(x)))

    part_sum = jnp.sum(jnp.where(mask, loss, 0.0), axis=(0, 1))     # (L,)
    part_cnt = jnp.sum(mask.astype(jnp.int32), axis=(0, 1))         # (L,)

    # (1, 8, L) output block (constraint-clean last two dims (8, L)); the
    # partial lives in sublane row 0, the remaining rows are zero.
    row = lax.broadcasted_iota(jnp.int32, sum_ref.shape, 1)
    sum_ref[...] = jnp.where(row == 0, part_sum[None, None, :], 0.0)
    cnt_ref[...] = jnp.where(row == 0, part_cnt[None, None, :], 0)


def _loss_lane_packed(scores, relevance, temperature, softmax_outputs,
                      vmem_limit, temp_budget, prefer_split):
    B, L = scores.shape

    # Largest lane tile whose (L, L, bt) temporaries + double-buffered I/O
    # columns fit the byte budget.
    per_lane_bytes = _LIVE_TEMPS * L * L * 4 + 4 * (4 * L + 4)
    bt = max(128, (temp_budget // per_lane_bytes) // 128 * 128)
    b_lanes = _round_up(B, 128)
    bt = min(bt, b_lanes)
    if prefer_split and bt >= b_lanes and b_lanes > 128:
        # 2 TensorCores: make sure the "parallel" grid axis has >= 2 steps.
        bt = min(b_lanes, _round_up(_cdiv(B, 2), 128))

    num_tiles = _cdiv(B, bt)
    b_pad = num_tiles * bt
    if b_pad != B:
        # Padded rows use constant (zero) relevance -> rel_diff <= 0 there ->
        # no extra pairs and no extra loss.
        pad = ((0, b_pad - B), (0, 0))
        scores = jnp.pad(scores, pad)
        relevance = jnp.pad(relevance, pad)

    # Wrapper-side transpose: batch onto the lane axis (layout plumbing only).
    s_t = jnp.transpose(scores)                   # (L, b_pad)
    r_t = jnp.transpose(relevance)

    kernel = functools.partial(
        _pairwise_logistic_kernel_lanes,
        temperature=float(temperature),
        softmax_outputs=bool(softmax_outputs),
    )

    part_sum, part_cnt = pl.pallas_call(
        kernel,
        out_shape=(jax.ShapeDtypeStruct((1, b_pad), jnp.float32),
                   jax.ShapeDtypeStruct((1, b_pad), jnp.int32)),
        grid_spec=pltpu.PrefetchScalarGridSpec(
            num_scalar_prefetch=0,
            grid=(num_tiles,),
            in_specs=[
                pl.BlockSpec((L, bt), lambda i: (0, i)),
                pl.BlockSpec((L, bt), lambda i: (0, i)),
            ],
            out_specs=[
                pl.BlockSpec((1, bt), lambda i: (0, i)),
                pl.BlockSpec((1, bt), lambda i: (0, i)),
            ],
        ),
        compiler_params=pltpu.CompilerParams(
            dimension_semantics=("parallel",),
            vmem_limit_bytes=vmem_limit),
    )(s_t, r_t)

    return part_sum, part_cnt


def _loss_row_major(scores, relevance, temperature, softmax_outputs,
                    vmem_limit, temp_budget, prefer_split):
    B, L = scores.shape

    per_row_bytes = _LIVE_TEMPS * L * L * 4
    # TODO(synk): j-block tiling for very large L where even an 8-row batch
    #             tile overruns the VMEM budget.
    bt = max(8, (temp_budget // per_row_bytes) // 8 * 8)
    b_rows = _round_up(B, 8)
    bt = min(bt, b_rows)
    if prefer_split and bt >= b_rows and b_rows > 8:
        bt = min(b_rows, _round_up(_cdiv(B, 2), 8))

    num_tiles = _cdiv(B, bt)
    b_pad = num_tiles * bt
    if b_pad != B:
        pad = ((0, b_pad - B), (0, 0))
        scores = jnp.pad(scores, pad)
        relevance = jnp.pad(relevance, pad)

    kernel = functools.partial(
        _pairwise_logistic_kernel_rows,
        temperature=float(temperature),
        softmax_outputs=bool(softmax_outputs),
    )

    part_sum, part_cnt = pl.pallas_call(
        kernel,
        out_shape=(jax.ShapeDtypeStruct((num_tiles, 8, L), jnp.float32),
                   jax.ShapeDtypeStruct((num_tiles, 8, L), jnp.int32)),
        grid_spec=pltpu.PrefetchScalarGridSpec(
            num_scalar_prefetch=0,
            grid=(num_tiles,),
            in_specs=[
                pl.BlockSpec((bt, L), lambda i: (i, 0)),
                pl.BlockSpec((bt, L), lambda i: (i, 0)),
            ],
            out_specs=[
                pl.BlockSpec((1, 8, L), lambda i: (i, 0, 0)),
                pl.BlockSpec((1, 8, L), lambda i: (i, 0, 0)),
            ],
        ),
        compiler_params=pltpu.CompilerParams(
            dimension_semantics=("parallel",),
            vmem_limit_bytes=vmem_limit),
    )(scores, relevance)

    return part_sum, part_cnt


def pairwise_logistic_loss(scores, relevance, *, temperature=1.0,
                           margin=None, softmax_outputs=False):
    """Equivalent of PairwiseLogisticLoss.forward (returns scalar f32).

    Returns NaN when no positive pairs exist (matches torch.mean over an
    empty boolean selection).
    """
    if margin is not None:
        # Matches the PyTorch module's __init__ behavior.
        raise NotImplementedError(
            "Yet to implement margins for pairwise logistic loss.")

    B, L = scores.shape
    vmem_limit, temp_budget, prefer_split = _vmem_plan()

    # Batch-on-lanes packing when the list length is short and the (L, L, 128)
    # temporaries fit the budget; items-on-lanes otherwise.
    lane_packed = (L < 128) and (_LIVE_TEMPS * L * L * 128 * 4 <= temp_budget)
    if lane_packed:
        part_sum, part_cnt = _loss_lane_packed(
            scores, relevance, temperature, softmax_outputs,
            vmem_limit, temp_budget, prefer_split)
    else:
        part_sum, part_cnt = _loss_row_major(
            scores, relevance, temperature, softmax_outputs,
            vmem_limit, temp_budget, prefer_split)

    total_sum = jnp.sum(part_sum)
    # Per-tile counts are exact int32; promote to f32 for the final reduce so
    # very large B*L^2 pair counts cannot overflow int32.
    total_cnt = jnp.sum(part_cnt.astype(jnp.float32))
    return total_sum / total_cnt


def _reference(scores, relevance, temperature=1.0, softmax_outputs=False):
    scores = scores.astype(jnp.float32)
    relevance = relevance.astype(jnp.float32)
    if softmax_outputs:
        scores = jax.nn.softmax(scores, axis=-1)
    sd = scores[..., :, None] - scores[..., None, :]
    rd = relevance[..., :, None] - relevance[..., None, :]
    mask = rd > 0
    loss = jnp.log1p(jnp.exp(-temperature * sd))
    return jnp.sum(jnp.where(mask, loss, 0.0)) / jnp.sum(mask)


if __name__ == "__main__":
    key = jax.random.PRNGKey(0)
    k_s, k_r, k_s2, k_r2 = jax.random.split(key, 4)

    # Small-L case: 16 lists of 8 items -> lane-packed (batch-on-lanes) path.
    B, L = 16, 8
    scores = jax.random.normal(k_s, (B, L), dtype=jnp.float32)
    relevance = jax.random.randint(k_r, (B, L), 0, 4).astype(jnp.float32)

    out = pairwise_logistic_loss(scores, relevance, temperature=1.0,
                                 softmax_outputs=False)
    out = jax.block_until_ready(out)
    ref = _reference(scores, relevance, temperature=1.0)
    assert jnp.allclose(out, ref, rtol=1e-5, atol=1e-5), (out, ref)

    # softmax_outputs branch + non-unit temperature.
    out2 = pairwise_logistic_loss(scores, relevance, temperature=2.0,
                                  softmax_outputs=True)
    out2 = jax.block_until_ready(out2)
    ref2 = _reference(scores, relevance, temperature=2.0, softmax_outputs=True)
    assert jnp.allclose(out2, ref2, rtol=1e-5, atol=1e-5), (out2, ref2)

    # Longer lists (L >= 128) exercise the row-major path.
    B2, L2 = 4, 128
    scores2 = jax.random.normal(k_s2, (B2, L2), dtype=jnp.float32)
    relevance2 = jax.random.randint(k_r2, (B2, L2), 0, 3).astype(jnp.float32)
    out3 = pairwise_logistic_loss(scores2, relevance2, temperature=0.5,
                                  softmax_outputs=False)
    out3 = jax.block_until_ready(out3)
    ref3 = _reference(scores2, relevance2, temperature=0.5)
    assert jnp.allclose(out3, ref3, rtol=1e-5, atol=1e-5), (out3, ref3)

    print("KERNEL_OK")
</pallas_src>

<mosaic_0001>
module attributes {stable_mosaic.version = 11 : i64} {
  func.func @_pairwise_logistic_kernel_lanes(%arg0: i32, %arg1: memref<8x128xf32, #tpu.memory_space<vmem>>, %arg2: memref<8x128xf32, #tpu.memory_space<vmem>>, %arg3: memref<1x128xf32, #tpu.memory_space<vmem>>, %arg4: memref<1x128xi32, #tpu.memory_space<vmem>>) attributes {dimension_semantics = [#tpu.dimension_semantics<parallel>], iteration_bounds = array<i64: 1>, scalar_prefetch = 0 : i64, scratch_operands = 0 : i64, tpu.core_type = #tpu.core_type<tc>, window_params = [{transform_indices = @transform_0, window_bounds = array<i64: 8, 128>}, {transform_indices = @transform_1, window_bounds = array<i64: 8, 128>}, {transform_indices = @transform_2, window_bounds = array<i64: 1, 128>}, {transform_indices = @transform_3, window_bounds = array<i64: 1, 128>}]} {
    %c0 = arith.constant 0 : index
    %c0_0 = arith.constant 0 : index
    %0 = vector.load %arg1[%c0, %c0_0] : memref<8x128xf32, #tpu.memory_space<vmem>>, vector<8x128xf32>
    %c0_1 = arith.constant 0 : index
    %c0_2 = arith.constant 0 : index
    %1 = vector.load %arg2[%c0_1, %c0_2] : memref<8x128xf32, #tpu.memory_space<vmem>>, vector<8x128xf32>
    %cst = arith.constant -1.000000e+00 : f32
    %2 = vector.broadcast %cst : f32 to vector<8x128xf32>
    %3 = arith.mulf %0, %2 : vector<8x128xf32>
    %4 = vector.shape_cast %3 : vector<8x128xf32> to vector<8x1x128xf32>
    %5 = vector.shape_cast %3 : vector<8x128xf32> to vector<1x8x128xf32>
    %6 = vector.broadcast %4 : vector<8x1x128xf32> to vector<8x8x128xf32>
    %7 = vector.broadcast %5 : vector<1x8x128xf32> to vector<8x8x128xf32>
    %8 = arith.subf %6, %7 : vector<8x8x128xf32>
    %9 = vector.shape_cast %1 : vector<8x128xf32> to vector<8x1x128xf32>
    %10 = vector.shape_cast %1 : vector<8x128xf32> to vector<1x8x128xf32>
    %11 = vector.broadcast %9 : vector<8x1x128xf32> to vector<8x8x128xf32>
    %12 = vector.broadcast %10 : vector<1x8x128xf32> to vector<8x8x128xf32>
    %13 = arith.subf %11, %12 : vector<8x8x128xf32>
    %cst_3 = arith.constant 0.000000e+00 : f32
    %14 = vector.broadcast %cst_3 : f32 to vector<8x8x128xf32>
    %15 = arith.cmpf ogt, %13, %14 : vector<8x8x128xf32>
    %cst_4 = arith.constant 0.000000e+00 : f32
    %16 = vector.broadcast %cst_4 : f32 to vector<8x8x128xf32>
    %17 = arith.maximumf %8, %16 : vector<8x8x128xf32>
    %18 = math.absf %8 : vector<8x8x128xf32>
    %cst_5 = arith.constant 0.000000e+00 : f32
    %19 = vector.broadcast %cst_5 : f32 to vector<8x8x128xf32>
    %20 = arith.subf %19, %18 : vector<8x8x128xf32>
    %21 = math.exp %20 : vector<8x8x128xf32>
    %22 = math.log1p %21 : vector<8x8x128xf32>
    %23 = arith.addf %17, %22 : vector<8x8x128xf32>
    %cst_6 = arith.constant 0.000000e+00 : f32
    %24 = vector.broadcast %cst_6 : f32 to vector<8x8x128xf32>
    %25 = arith.select %15, %23, %24 : vector<8x8x128xi1>, vector<8x8x128xf32>
    %cst_7 = arith.constant dense<0.000000e+00> : vector<128xf32>
    %26 = vector.multi_reduction <add>, %25, %cst_7 [0, 1] : vector<8x8x128xf32> to vector<128xf32>
    %27 = vector.shape_cast %26 : vector<128xf32> to vector<1x128xf32>
    %c0_8 = arith.constant 0 : index
    %c0_9 = arith.constant 0 : index
    %28 = vector.load %arg3[%c0_8, %c0_9] : memref<1x128xf32, #tpu.memory_space<vmem>>, vector<1x128xf32>
    tpu.vector_store %arg3[%c0_8, %c0_9], %27 {strides = array<i32>} : memref<1x128xf32, #tpu.memory_space<vmem>>, vector<1x128xf32>,
    %29 = arith.extui %15 : vector<8x8x128xi1> to vector<8x8x128xi32>
    %cst_10 = arith.constant dense<0> : vector<128xi32>
    %30 = vector.multi_reduction <add>, %29, %cst_10 [0, 1] : vector<8x8x128xi32> to vector<128xi32>
    %31 = vector.shape_cast %30 : vector<128xi32> to vector<1x128xi32>
    %c0_11 = arith.constant 0 : index
    %c0_12 = arith.constant 0 : index
    %32 = vector.load %arg4[%c0_11, %c0_12] : memref<1x128xi32, #tpu.memory_space<vmem>>, vector<1x128xi32>
    tpu.vector_store %arg4[%c0_11, %c0_12], %31 {strides = array<i32>} : memref<1x128xi32, #tpu.memory_space<vmem>>, vector<1x128xi32>,
    return
  }
  func.func @transform_0(%arg0: i32) -> (i32, i32) {
    %c0_i32 = arith.constant 0 : i32
    %c0_i32_0 = arith.constant 0 : i32
    return %c0_i32, %arg0 : i32, i32
  }
  func.func @transform_1(%arg0: i32) -> (i32, i32) {
    %c0_i32 = arith.constant 0 : i32
    %c0_i32_0 = arith.constant 0 : i32
    return %c0_i32, %arg0 : i32, i32
  }
  func.func @transform_2(%arg0: i32) -> (i32, i32) {
    %c0_i32 = arith.constant 0 : i32
    %c0_i32_0 = arith.constant 0 : i32
    return %c0_i32, %arg0 : i32, i32
  }
  func.func @transform_3(%arg0: i32) -> (i32, i32) {
    %c0_i32 = arith.constant 0 : i32
    %c0_i32_0 = arith.constant 0 : i32
    return %c0_i32, %arg0 : i32, i32
  }
}

</mosaic_0001>

<llo_original>
// kernel: tpu_custom_call.1
$region0: #{tpu_custom_call.1}
  #allocation0 [shape = 'u32[]', space=smem, size = 0x4, offset = 0x4, fixed_abs, tag = 'smem constant byte address 0x4 - core index']
  #allocation1 [shape = 'u32[144,128]{1,0:T(1,128)}', space=vmem, size = 0x12000, scoped, tag = 'internal scratch']
  %s0 = inlined_call_operand.hbm [shape: f32[8,128], index: 0, kind: input, shape index: {}]
  %s1 = inlined_call_operand.hbm [shape: f32[8,128], index: 1, kind: input, shape index: {}]
  %s2 = inlined_call_operand.hbm [shape: f32[1,128], index: 2, kind: output, shape index: {0}]
  %s3 = inlined_call_operand.hbm [shape: s32[1,128], index: 3, kind: output, shape index: {1}]
  %4 = xla_tuple %s2, %s3
  %s5 = sld [smem:[#allocation0]]
  $region34: #{tpu_custom_call.1} parent=0
    _
  %s7 = ssub.s32 1, %s5
  %s8 = scalar_select 0, %s7, %s5
  $region1: #{tpu_custom_call.1} parent=0
    #allocation2 [shape = 'u8[4096]{0}', space=vmem, size = 0x1000, scoped, tag = 'input window, operand 0, single buffered']
    #allocation3 [shape = 's32[1]{0}', space=sflag, size = 0x4, scoped, tag = 'scoped memory for tpu_custom_call.1']
    #allocation4 [shape = 's32[1]{0}', space=sflag, size = 0x4, scoped, tag = 'scoped memory for tpu_custom_call.1']
    #allocation5 [shape = 'u8[4096]{0}', space=vmem, size = 0x1000, scoped, tag = 'input window, operand 1, single buffered']
    #allocation6 [shape = 's32[1]{0}', space=sflag, size = 0x4, scoped, tag = 'scoped memory for tpu_custom_call.1']
    #allocation7 [shape = 'u8[512]{0}', space=vmem, size = 0x400, scoped, tag = 'output window, operand 0, single buffered']
    #allocation8 [shape = 'u8[512]{0}', space=vmem, size = 0x400, scoped, tag = 'output window, operand 1, single buffered']
    #allocation9 [shape = 's32[1]{0}', space=sflag, size = 0x4, scoped, tag = 'scoped memory for tpu_custom_call.1']
    %9 = vsyncpa [#allocation3], 0
    %10 = vsyncpa [#allocation6], 0
    %11 = vsyncpa [#allocation4], 0
    %12 = vsyncpa [#allocation9], 0
    // Predicated region
    $region2: #{tpu_custom_call.1} parent=1 // pred_check
      _
    $region3: #{tpu_custom_call.1} parent=1 // pred_check_branch
      %14 = sbr.rel (0) target = $region5
    $region4: #{tpu_custom_call.1} parent=1 // pred_region
      %s16 = ssub.s32 128, 128
      %17 = vsyncadd [#allocation3], %s16
      %s19 = sshll.u32 [#allocation2], 4
      %s20 = int_to_ptr.vmem [resolvable:$true] %s19
      %22 = dma.hbm_to_vmem [thread:$0]  %s0, 128, %s20, [#allocation3]
    $region5: #{tpu_custom_call.1} parent=1 // pred_fallthru
      _
    // Predicated region
    $region6: #{tpu_custom_call.1} parent=1 // pred_check
      _
    $region7: #{tpu_custom_call.1} parent=1 // pred_check_branch
      %24 = sbr.rel (0) target = $region9
    $region8: #{tpu_custom_call.1} parent=1 // pred_region
      %s26 = ssub.s32 128, 128
      %27 = vsyncadd [#allocation6], %s26
      %s29 = sshll.u32 [#allocation5], 4
      %s30 = int_to_ptr.vmem [resolvable:$true] %s29
      %32 = dma.hbm_to_vmem [thread:$0]  %s1, 128, %s30, [#allocation6]
    $region9: #{tpu_custom_call.1} parent=1 // pred_fallthru
      _
    // Predicated region
    $region10: #{tpu_custom_call.1} parent=1 // pred_check
      _
    $region11: #{tpu_custom_call.1} parent=1 // pred_check_branch
      %34 = sbr.rel (0) target = $region13
    $region12: #{tpu_custom_call.1} parent=1 // pred_region
      %35 = dma.done [#allocation3], 128
    $region13: #{tpu_custom_call.1} parent=1 // pred_fallthru
      _
    // Predicated region
    $region14: #{tpu_custom_call.1} parent=1 // pred_check
      _
    $region15: #{tpu_custom_call.1} parent=1 // pred_check_branch
      %37 = sbr.rel (0) target = $region17
    $region16: #{tpu_custom_call.1} parent=1 // pred_region
      %38 = dma.done [#allocation6], 128
    $region17: #{tpu_custom_call.1} parent=1 // pred_fallthru
      _
    %v39 = vld [vmem:[#allocation2] sm:$0xff]
    %v40 = vld [vmem:[#allocation5] sm:$0xff]
    %v41 = vmul.f32 %v39, -1.0
    %v43 = vcombine.high %v41, %v41
    %v45 = vunpack.c.l.s4 1966171168
    %v46 = vunpack.c.0.s8 %v45
    %v47 = vlaneseq
    %v48 = vshrl.u32 %v47, 7
    %v49 = vsub.s32 %v46, %v48
    %v50 = vrot.slane %v41, %v49
    %v52 = vunpack.c.l.s4 1966171168
    %v53 = vunpack.c.0.s8 %v52
    %v54 = vlaneseq
    %v55 = vshrl.u32 %v54, 7
    %v56 = vsub.s32 %v53, %v55
    %v57 = vrot.slane %v43, %v56
    %v58 = vcombine.high %v50, %v50
    %v59 = vcombine.high %v57, %v57
    %v61 = vunpack.c.l.s4 1966171168
    %v62 = vunpack.c.0.s8 %v61
    %v63 = vlaneseq
    %v64 = vshrl.u32 %v63, 7
    %v65 = vsub.s32 %v62, %v64
    %v66 = vrot.slane %v50, %v65
    %v68 = vunpack.c.l.s4 1966171168
    %v69 = vunpack.c.0.s8 %v68
    %v70 = vlaneseq
    %v71 = vshrl.u32 %v70, 7
    %v72 = vsub.s32 %v69, %v71
    %v73 = vrot.slane %v57, %v72
    %v75 = vunpack.c.l.s4 1966171168
    %v76 = vunpack.c.0.s8 %v75
    %v77 = vlaneseq
    %v78 = vshrl.u32 %v77, 7
    %v79 = vsub.s32 %v76, %v78
    %v80 = vrot.slane %v58, %v79
    %v82 = vunpack.c.l.s4 1966171168
    %v83 = vunpack.c.0.s8 %v82
    %v84 = vlaneseq
    %v85 = vshrl.u32 %v84, 7
    %v86 = vsub.s32 %v83, %v85
    %v87 = vrot.slane %v59, %v86
    %v88 = vcombine.high %v66, %v66
    %v89 = vcombine.high %v73, %v73
    %v90 = vcombine.high %v80, %v80
    %v91 = vcombine.high %v87, %v87
    %v92 = vlaneseq
    %v93 = vshrl.u32 %v92, 7
    %v94 = vsub.s32 0, %v93
    %v95 = vrot.slane %v66, %v94
    %v96 = vlaneseq
    %v97 = vshrl.u32 %v96, 7
    %v98 = vsub.s32 0, %v97
    %v99 = vrot.slane %v80, %v98
    %v100 = vlaneseq
    %v101 = vshrl.u32 %v100, 7
    %v102 = vsub.s32 0, %v101
    %v103 = vrot.slane %v88, %v102
    %v104 = vlaneseq
    %v105 = vshrl.u32 %v104, 7
    %v106 = vsub.s32 0, %v105
    %v107 = vrot.slane %v90, %v106
    %v108 = vlaneseq
    %v109 = vshrl.u32 %v108, 7
    %v110 = vsub.s32 0, %v109
    %v111 = vrot.slane %v73, %v110
    %v112 = vlaneseq
    %v113 = vshrl.u32 %v112, 7
    %v114 = vsub.s32 0, %v113
    %v115 = vrot.slane %v87, %v114
    %v116 = vlaneseq
    %v117 = vshrl.u32 %v116, 7
    %v118 = vsub.s32 0, %v117
    %v119 = vrot.slane %v89, %v118
    %v120 = vlaneseq
    %v121 = vshrl.u32 %v120, 7
    %v122 = vsub.s32 0, %v121
    %v123 = vrot.slane %v91, %v122
    %v132 = vsub.f32 %v95, %v41
    %v133 = vsub.f32 %v99, %v41
    %v134 = vsub.f32 %v103, %v41
    %v135 = vsub.f32 %v107, %v41
    %v136 = vsub.f32 %v111, %v41
    %v137 = vsub.f32 %v115, %v41
    %v138 = vsub.f32 %v119, %v41
    %v139 = vsub.f32 %v123, %v41
    %v141 = vcombine.high %v40, %v40
    %v143 = vunpack.c.l.s4 1966171168
    %v144 = vunpack.c.0.s8 %v143
    %v145 = vlaneseq
    %v146 = vshrl.u32 %v145, 7
    %v147 = vsub.s32 %v144, %v146
    %v148 = vrot.slane %v40, %v147
    %v150 = vunpack.c.l.s4 1966171168
    %v151 = vunpack.c.0.s8 %v150
    %v152 = vlaneseq
    %v153 = vshrl.u32 %v152, 7
    %v154 = vsub.s32 %v151, %v153
    %v155 = vrot.slane %v141, %v154
    %v156 = vcombine.high %v148, %v148
    %v157 = vcombine.high %v155, %v155
    %v159 = vunpack.c.l.s4 1966171168
    %v160 = vunpack.c.0.s8 %v159
    %v161 = vlaneseq
    %v162 = vshrl.u32 %v161, 7
    %v163 = vsub.s32 %v160, %v162
    %v164 = vrot.slane %v148, %v163
    %v166 = vunpack.c.l.s4 1966171168
    %v167 = vunpack.c.0.s8 %v166
    %v168 = vlaneseq
    %v169 = vshrl.u32 %v168, 7
    %v170 = vsub.s32 %v167, %v169
    %v171 = vrot.slane %v155, %v170
    %v173 = vunpack.c.l.s4 1966171168
    %v174 = vunpack.c.0.s8 %v173
    %v175 = vlaneseq
    %v176 = vshrl.u32 %v175, 7
    %v177 = vsub.s32 %v174, %v176
    %v178 = vrot.slane %v156, %v177
    %v180 = vunpack.c.l.s4 1966171168
    %v181 = vunpack.c.0.s8 %v180
    %v182 = vlaneseq
    %v183 = vshrl.u32 %v182, 7
    %v184 = vsub.s32 %v181, %v183
    %v185 = vrot.slane %v157, %v184
    %v186 = vcombine.high %v164, %v164
    %v187 = vcombine.high %v171, %v171
    %v188 = vcombine.high %v178, %v178
    %v189 = vcombine.high %v185, %v185
    %v190 = vlaneseq
    %v191 = vshrl.u32 %v190, 7
    %v192 = vsub.s32 0, %v191
    %v193 = vrot.slane %v164, %v192
    %v194 = vlaneseq
    %v195 = vshrl.u32 %v194, 7
    %v196 = vsub.s32 0, %v195
    %v197 = vrot.slane %v178, %v196
    %v198 = vlaneseq
    %v199 = vshrl.u32 %v198, 7
    %v200 = vsub.s32 0, %v199
    %v201 = vrot.slane %v186, %v200
    %v202 = vlaneseq
    %v203 = vshrl.u32 %v202, 7
    %v204 = vsub.s32 0, %v203
    %v205 = vrot.slane %v188, %v204
    %v206 = vlaneseq
    %v207 = vshrl.u32 %v206, 7
    %v208 = vsub.s32 0, %v207
    %v209 = vrot.slane %v171, %v208
    %v210 = vlaneseq
    %v211 = vshrl.u32 %v210, 7
    %v212 = vsub.s32 0, %v211
    %v213 = vrot.slane %v185, %v212
    %v214 = vlaneseq
    %v215 = vshrl.u32 %v214, 7
    %v216 = vsub.s32 0, %v215
    %v217 = vrot.slane %v187, %v216
    %v218 = vlaneseq
    %v219 = vshrl.u32 %v218, 7
    %v220 = vsub.s32 0, %v219
    %v221 = vrot.slane %v189, %v220
    %v230 = vsub.f32 %v193, %v40
    %v231 = vsub.f32 %v197, %v40
    %v232 = vsub.f32 %v201, %v40
    %v233 = vsub.f32 %v205, %v40
    %v234 = vsub.f32 %v209, %v40
    %v235 = vsub.f32 %v213, %v40
    %v236 = vsub.f32 %v217, %v40
    %v237 = vsub.f32 %v221, %v40
    %vm238 = vcmp.gt.f32.partialorder %v230, 0.0
    %vm239 = vcmp.gt.f32.partialorder %v231, 0.0
    %vm240 = vcmp.gt.f32.partialorder %v232, 0.0
    %vm241 = vcmp.gt.f32.partialorder %v233, 0.0
    %vm242 = vcmp.gt.f32.partialorder %v234, 0.0
    %vm243 = vcmp.gt.f32.partialorder %v235, 0.0
    %vm244 = vcmp.gt.f32.partialorder %v236, 0.0
    %vm245 = vcmp.gt.f32.partialorder %v237, 0.0
    %v246 = vmax.f32 %v132, 0.0
    %v247 = vmax.f32 %v133, 0.0
    %v248 = vmax.f32 %v134, 0.0
    %v249 = vmax.f32 %v135, 0.0
    %v250 = vmax.f32 %v136, 0.0
    %v251 = vmax.f32 %v137, 0.0
    %v252 = vmax.f32 %v138, 0.0
    %v253 = vmax.f32 %v139, 0.0
    %v254 = vand.u32 2147483647, %v132
    %v255 = vand.u32 2147483647, %v133
    %v256 = vand.u32 2147483647, %v134
    %v257 = vand.u32 2147483647, %v135
    %v258 = vand.u32 2147483647, %v136
    %v259 = vand.u32 2147483647, %v137
    %v260 = vand.u32 2147483647, %v138
    %v261 = vand.u32 2147483647, %v139
    %v262 = vsub.f32 0.0, %v254
    %v263 = vsub.f32 0.0, %v255
    %v264 = vsub.f32 0.0, %v256
    %v265 = vsub.f32 0.0, %v257
    %v266 = vsub.f32 0.0, %v258
    %v267 = vsub.f32 0.0, %v259
    %v268 = vsub.f32 0.0, %v260
    %v269 = vsub.f32 0.0, %v261
    %v270 = vmul.f32 %v262, 1.442695
    %v271 = vpow.pop %v270
    %v272 = vmul.f32 %v263, 1.442695
    %v273 = vpow.pop %v272
    %v274 = vmul.f32 %v264, 1.442695
    %v275 = vpow.pop %v274
    %v276 = vmul.f32 %v265, 1.442695
    %v277 = vpow.pop %v276
    %v278 = vmul.f32 %v266, 1.442695
    %v279 = vpow.pop %v278
    %v280 = vmul.f32 %v267, 1.442695
    %v281 = vpow.pop %v280
    %v282 = vmul.f32 %v268, 1.442695
    %v283 = vpow.pop %v282
    %v284 = vmul.f32 %v269, 1.442695
    %v285 = vpow.pop %v284
    %v286 = vadd.f32 %v271, 1.0
    %v287 = vlog2.pop %v286
    %v288 = vmul.f32 %v287, 0.6931472
    %v289 = vmul.f32 -0.5, %v271
    %v290 = vadd.f32 %v289, 1.0
    %v291 = vmul.f32 %v290, %v271
    %v292 = vand.u32 2147483647, %v271
    %vm293 = vcmp.lt.f32.partialorder %v292, 0.0004427343
    %v294 = vsel %vm293, %v291, %v288
    %v295 = vadd.f32 %v273, 1.0
    %v296 = vlog2.pop %v295
    %v297 = vmul.f32 %v296, 0.6931472
    %v298 = vmul.f32 -0.5, %v273
    %v299 = vadd.f32 %v298, 1.0
    %v300 = vmul.f32 %v299, %v273
    %v301 = vand.u32 2147483647, %v273
    %vm302 = vcmp.lt.f32.partialorder %v301, 0.0004427343
    %v303 = vsel %vm302, %v300, %v297
    %v304 = vadd.f32 %v275, 1.0
    %v305 = vlog2.pop %v304
    %v306 = vmul.f32 %v305, 0.6931472
    %v307 = vmul.f32 -0.5, %v275
    %v308 = vadd.f32 %v307, 1.0
    %v309 = vmul.f32 %v308, %v275
    %v310 = vand.u32 2147483647, %v275
    %vm311 = vcmp.lt.f32.partialorder %v310, 0.0004427343
    %v312 = vsel %vm311, %v309, %v306
    %v313 = vadd.f32 %v277, 1.0
    %v314 = vlog2.pop %v313
    %v315 = vmul.f32 %v314, 0.6931472
    %v316 = vmul.f32 -0.5, %v277
    %v317 = vadd.f32 %v316, 1.0
    %v318 = vmul.f32 %v317, %v277
    %v319 = vand.u32 2147483647, %v277
    %vm320 = vcmp.lt.f32.partialorder %v319, 0.0004427343
    %v321 = vsel %vm320, %v318, %v315
    %v322 = vadd.f32 %v279, 1.0
    %v323 = vlog2.pop %v322
    %v324 = vmul.f32 %v323, 0.6931472
    %v325 = vmul.f32 -0.5, %v279
    %v326 = vadd.f32 %v325, 1.0
    %v327 = vmul.f32 %v326, %v279
    %v328 = vand.u32 2147483647, %v279
    %vm329 = vcmp.lt.f32.partialorder %v328, 0.0004427343
    %v330 = vsel %vm329, %v327, %v324
    %v331 = vadd.f32 %v281, 1.0
    %v332 = vlog2.pop %v331
    %v333 = vmul.f32 %v332, 0.6931472
    %v334 = vmul.f32 -0.5, %v281
    %v335 = vadd.f32 %v334, 1.0
    %v336 = vmul.f32 %v335, %v281
    %v337 = vand.u32 2147483647, %v281
    %vm338 = vcmp.lt.f32.partialorder %v337, 0.0004427343
    %v339 = vsel %vm338, %v336, %v333
    %v340 = vadd.f32 %v283, 1.0
    %v341 = vlog2.pop %v340
    %v342 = vmul.f32 %v341, 0.6931472
    %v343 = vmul.f32 -0.5, %v283
    %v344 = vadd.f32 %v343, 1.0
    %v345 = vmul.f32 %v344, %v283
    %v346 = vand.u32 2147483647, %v283
    %vm347 = vcmp.lt.f32.partialorder %v346, 0.0004427343
    %v348 = vsel %vm347, %v345, %v342
    %v349 = vadd.f32 %v285, 1.0
    %v350 = vlog2.pop %v349
    %v351 = vmul.f32 %v350, 0.6931472
    %v352 = vmul.f32 -0.5, %v285
    %v353 = vadd.f32 %v352, 1.0
    %v354 = vmul.f32 %v353, %v285
    %v355 = vand.u32 2147483647, %v285
    %vm356 = vcmp.lt.f32.partialorder %v355, 0.0004427343
    %v357 = vsel %vm356, %v354, %v351
    %v358 = vadd.f32 %v246, %v294
    %v359 = vadd.f32 %v247, %v303
    %v360 = vadd.f32 %v248, %v312
    %v361 = vadd.f32 %v249, %v321
    %v362 = vadd.f32 %v250, %v330
    %v363 = vadd.f32 %v251, %v339
    %v364 = vadd.f32 %v252, %v348
    %v365 = vadd.f32 %v253, %v357
    %v366 = vsel %vm238, %v358, 0.0
    %v367 = vsel %vm239, %v359, 0.0
    %v368 = vsel %vm240, %v360, 0.0
    %v369 = vsel %vm241, %v361, 0.0
    %v370 = vsel %vm242, %v362, 0.0
    %v371 = vsel %vm243, %v363, 0.0
    %v372 = vsel %vm244, %v364, 0.0
    %v373 = vsel %vm245, %v365, 0.0
    %v374 = vadd.f32 %v366, %v367
    %v375 = vadd.f32 %v374, %v368
    %v376 = vadd.f32 %v375, %v369
    %v377 = vadd.f32 %v376, %v370
    %v378 = vadd.f32 %v377, %v371
    %v379 = vadd.f32 %v378, %v372
    %v380 = vadd.f32 %v379, %v373
    %v381 = vrot.slane %v380, 4
    %v382 = vadd.f32 %v380, %v381
    %v383 = vrot.slane %v382, 2
    %v384 = vadd.f32 %v382, %v383
    %v385 = vrot.slane %v384, 1
    %v386 = vadd.f32 %v384, %v385
    %387 = vst [vmem:[#allocation7] sm:$0x1] %v386
    %v388 = vsel %vm238, 1, 0
    %v389 = vsel %vm239, 1, 0
    %v390 = vsel %vm240, 1, 0
    %v391 = vsel %vm241, 1, 0
    %v392 = vsel %vm242, 1, 0
    %v393 = vsel %vm243, 1, 0
    %v394 = vsel %vm244, 1, 0
    %v395 = vsel %vm245, 1, 0
    %v396 = vadd.s32 %v388, %v392
    %v397 = vadd.s32 %v389, %v393
    %v398 = vadd.s32 %v390, %v394
    %v399 = vadd.s32 %v391, %v395
    %v400 = vadd.s32 %v396, %v397
    %v401 = vadd.s32 %v398, %v399
    %v402 = vadd.s32 %v400, %v401
    %v403 = vrot.slane %v402, 4
    %v404 = vadd.s32 %v402, %v403
    %v405 = vrot.slane %v404, 2
    %v406 = vadd.s32 %v404, %v405
    %v407 = vrot.slane %v406, 1
    %v408 = vadd.s32 %v406, %v407
    %409 = vst [vmem:[#allocation8] sm:$0x1] %v408
    // Predicated region
    $region18: #{tpu_custom_call.1} parent=1 // pred_check
      _
    $region19: #{tpu_custom_call.1} parent=1 // pred_check_branch
      %411 = sbr.rel (0) target = $region21
    $region20: #{tpu_custom_call.1} parent=1 // pred_region
      %s413 = ssub.s32 16, 16
      %414 = vsyncadd [#allocation4], %s413
      %s416 = sshll.u32 [#allocation7], 4
      %s417 = int_to_ptr.vmem [resolvable:$true] %s416
      %419 = dma.vmem_to_hbm [thread:$0]  %s417, 16, %s2, [#allocation4]
    $region21: #{tpu_custom_call.1} parent=1 // pred_fallthru
      _
    // Predicated region
    $region22: #{tpu_custom_call.1} parent=1 // pred_check
      _
    $region23: #{tpu_custom_call.1} parent=1 // pred_check_branch
      %421 = sbr.rel (0) target = $region25
    $region24: #{tpu_custom_call.1} parent=1 // pred_region
      %s423 = ssub.s32 16, 16
      %424 = vsyncadd [#allocation9], %s423
      %s426 = sshll.u32 [#allocation8], 4
      %s427 = int_to_ptr.vmem [resolvable:$true] %s426
      %429 = dma.vmem_to_hbm [thread:$0]  %s427, 16, %s3, [#allocation9]
    $region25: #{tpu_custom_call.1} parent=1 // pred_fallthru
      _
    // Predicated region
    $region26: #{tpu_custom_call.1} parent=1 // pred_check
      _
    $region27: #{tpu_custom_call.1} parent=1 // pred_check_branch
      %431 = sbr.rel (0) target = $region29
    $region28: #{tpu_custom_call.1} parent=1 // pred_region
      %432 = dma.done [#allocation4], 16
    $region29: #{tpu_custom_call.1} parent=1 // pred_fallthru
      _
    // Predicated region
    $region30: #{tpu_custom_call.1} parent=1 // pred_check
      _
    $region31: #{tpu_custom_call.1} parent=1 // pred_check_branch
      %434 = sbr.rel (0) target = $region33
    $region32: #{tpu_custom_call.1} parent=1 // pred_region
      %435 = dma.done [#allocation9], 16
    $region33: #{tpu_custom_call.1} parent=1 // pred_fallthru
      _
    %436 = vsyncpa [#allocation3], 1
    %437 = vsyncpa [#allocation6], 1
    %438 = vsyncpa [#allocation4], 1
    %439 = vsyncpa [#allocation9], 1

</llo_original>
